<compile_context>
chip_gen: v6e
topology: v6e:2x2x1
jax: 0.10.0
libtpu: 0.0.40
codegen_flags: <defaults>
</compile_context>

<pallas_src>
import jax
import jax.numpy as jnp
from jax.experimental import pallas as pl
from jax.experimental.pallas import tpu as pltpu


def _round_up(a, b):
    return (a + b - 1) // b * b


def _default_act_dtype():
    """bf16 activations on chips with a bf16 VPU (v6e / v7x); f32 otherwise (v5e/unknown)."""
    try:
        kind = jax.devices()[0].device_kind.lower()
    except Exception:
        return jnp.float32
    if "v6" in kind or "v7" in kind:
        return jnp.bfloat16
    return jnp.float32


def _make_kernel(act_dtype):
    def mlp_kernel(x_ref, w1_ref, b1_ref, wp_ref, bp_ref, wo_ref, bo_ref, o_ref):
        # x_ref : (8, T)       bf16       -- features on sublanes, batch on lanes
        # w1_ref: (32, 8)      bf16       -- first layer, feature dim zero-padded 7->8
        # b1_ref: (32, 1)      act_dtype
        # wp_ref: (4, 32, 32)  bf16       -- the 4 hidden layers
        # bp_ref: (4, 32, 1)   act_dtype
        # wo_ref: (8, 32)      bf16       -- output layer zero-padded 1->8 rows
        # bo_ref: (8, 1)       f32
        # o_ref : (1, T)       f32        -- lane-dense output slab

        # Linear(7->32) + ReLU.  K=8 matmul; batch (T) feeds the MXU N-dim.
        h = jnp.dot(w1_ref[...], x_ref[...],
                    preferred_element_type=jnp.float32).astype(act_dtype) + b1_ref[...]
        h = jnp.maximum(h, 0.0)

        # Dropout(0.2) is identity at inference (model.eval()).

        # 4 x [Linear(32,32) + ReLU]; bias-add / ReLU / storage in act_dtype
        # (bf16 on v6e/v7x -> half the VALU + activation traffic; f32 on v5e).
        for i in range(4):
            h = jnp.dot(wp_ref[i], h.astype(jnp.bfloat16),
                        preferred_element_type=jnp.float32).astype(act_dtype) + bp_ref[i]
            h = jnp.maximum(h, 0.0)

        # Output Linear(32,1): padded to only 8 rows; row 0 carries real weights.
        z = jnp.dot(wo_ref[...], h.astype(jnp.bfloat16),
                    preferred_element_type=jnp.float32)
        logits = z[0:1, :] + bo_ref[0:1, :]              # (1, T) f32

        # Sigmoid: exp and approx reciprocal both route to the EUP slot.
        o_ref[...] = pl.reciprocal(1.0 + jnp.exp(-logits),
                                   approx=True).astype(o_ref.dtype)

    return mlp_kernel


def _pack_params(params, act_dtype):
    """params: list of (W, b) in PyTorch layout, W = (out_features, in_features)."""
    (w1, b1) = params[0]
    hidden_layers = params[1:-1]
    (wo, bo) = params[-1]
    hidden, in1 = w1.shape                               # (32, 7)

    # First layer: pad the feature dim 7 -> 8 (zero column, absorbed for free).
    w1p = jnp.zeros((hidden, 8), jnp.float32).at[:, :in1].set(w1).astype(jnp.bfloat16)
    b1p = b1.reshape(hidden, 1).astype(act_dtype)

    # 4 hidden layers packed into one (4, 32, 32) weight / (4, 32, 1) bias tensor.
    wp = jnp.stack([w for (w, _) in hidden_layers]).astype(jnp.bfloat16)
    bp = jnp.stack([b for (_, b) in hidden_layers]).reshape(
        len(hidden_layers), hidden, 1).astype(act_dtype)

    # Output layer (1, 32) zero-padded to 8 rows (minimum f32 sublane tile).
    o_f, i_f = wo.shape
    wop = jnp.zeros((8, hidden), jnp.float32).at[:o_f, :i_f].set(wo).astype(jnp.bfloat16)
    bop = jnp.zeros((8, 1), jnp.float32).at[:o_f, 0].set(bo)
    return w1p, b1p, wp, bp, wop, bop


def mlp_forward(x, params, tile_n=16384, act_dtype=None):
    """x: (N, 7) float32; params: list of (W, b), W in PyTorch (out, in) layout.
    Returns (N, 1) float32 probabilities."""
    n, in_f = x.shape
    if act_dtype is None:
        act_dtype = _default_act_dtype()

    # tile_n must be a multiple of 128 (lane width); clamp to the padded batch.
    tile_n = max(128, _round_up(int(tile_n), 128))
    tile_n = min(tile_n, _round_up(max(n, 1), 128))
    n_pad = _round_up(n, tile_n)

    # Wrapper-side layout plumbing (cast bf16 + transpose to batch-on-lanes +
    # zero-pad features 7->8 and batch).  Fuses under XLA; for max perf, jit
    # this wrapper or feed a pre-transposed (8, N) bf16 input from upstream.
    xt = jnp.pad(x.astype(jnp.bfloat16).T, ((0, 8 - in_f), (0, n_pad - n)))

    w1p, b1p, wp, bp, wop, bop = _pack_params(params, act_dtype)

    grid = (n_pad // tile_n,)
    out = pl.pallas_call(
        _make_kernel(act_dtype),
        out_shape=jax.ShapeDtypeStruct((1, n_pad), jnp.float32),
        grid=grid,
        in_specs=[
            pl.BlockSpec((8, tile_n), lambda i: (0, i)),        # x tile (pipelined)
            pl.BlockSpec((32, 8), lambda i: (0, 0)),            # W1 (VMEM-resident)
            pl.BlockSpec((32, 1), lambda i: (0, 0)),            # b1
            pl.BlockSpec((4, 32, 32), lambda i: (0, 0, 0)),     # hidden W (resident)
            pl.BlockSpec((4, 32, 1), lambda i: (0, 0, 0)),      # hidden b
            pl.BlockSpec((8, 32), lambda i: (0, 0)),            # output W (8-row pad)
            pl.BlockSpec((8, 1), lambda i: (0, 0)),             # output b
        ],
        out_specs=pl.BlockSpec((1, tile_n), lambda i: (0, i)),  # lane-dense output
        compiler_params=pltpu.CompilerParams(
            # TODO(synk): on v7x verify both TCs are used; else pltpu.CORE_PARALLEL.
            dimension_semantics=("parallel",),
            vmem_limit_bytes=32 * 1024 * 1024),
    )(xt, w1p, b1p, wp, bp, wop, bop)

    return out[0, :n].reshape(n, 1)


def mlp_reference(x, params):
    """Pure-JAX f32 reference (Dropout is identity in eval mode)."""
    h = x
    for i, (w, b) in enumerate(params):
        h = h @ w.T + b
        if i < len(params) - 1:
            h = jnp.maximum(h, 0.0)
    return 1.0 / (1.0 + jnp.exp(-h))


def init_params(key):
    """Deterministic init mimicking PyTorch Linear default, PyTorch (out, in) layout."""
    dims = [(7, 32), (32, 32), (32, 32), (32, 32), (32, 32), (32, 1)]
    params = []
    for (fan_in, fan_out) in dims:
        key, kw, kb = jax.random.split(key, 3)
        bound = 1.0 / jnp.sqrt(jnp.float32(fan_in))
        w = jax.random.uniform(kw, (fan_out, fan_in), jnp.float32, -bound, bound)
        b = jax.random.uniform(kb, (fan_out,), jnp.float32, -bound, bound)
        params.append((w, b))
    return params


if __name__ == "__main__":
    key = jax.random.PRNGKey(0)
    key, kx = jax.random.split(key)
    params = init_params(key)

    # Primary test (single tile, auto activation dtype for this chip).
    batch = 8
    x = jax.random.normal(kx, (batch, 7), dtype=jnp.float32)
    out = jax.block_until_ready(mlp_forward(x, params))
    ref = mlp_reference(x, params)
    assert out.shape == (batch, 1), out.shape
    assert bool(jnp.all((out >= 0.0) & (out <= 1.0)))
    assert bool(jnp.allclose(out, ref, atol=5e-2)), float(jnp.max(jnp.abs(out - ref)))

    # Multi-tile batch grid + padding path (300 rows, 128-lane tiles), forced f32 path.
    key, kx2 = jax.random.split(key)
    x2 = jax.random.normal(kx2, (300, 7), dtype=jnp.float32)
    out2 = jax.block_until_ready(
        mlp_forward(x2, params, tile_n=128, act_dtype=jnp.float32))
    ref2 = mlp_reference(x2, params)
    assert out2.shape == (300, 1), out2.shape
    assert bool(jnp.all((out2 >= 0.0) & (out2 <= 1.0)))
    assert bool(jnp.allclose(out2, ref2, atol=5e-2)), float(jnp.max(jnp.abs(out2 - ref2)))

    # Robustness: a non-multiple-of-128 tile_n must be rounded, not fail lowering.
    key, kx3 = jax.random.split(key)
    x3 = jax.random.normal(kx3, (77, 7), dtype=jnp.float32)
    out3 = jax.block_until_ready(mlp_forward(x3, params, tile_n=1000))
    ref3 = mlp_reference(x3, params)
    assert out3.shape == (77, 1), out3.shape
    assert bool(jnp.allclose(out3, ref3, atol=5e-2)), float(jnp.max(jnp.abs(out3 - ref3)))

    print("KERNEL_OK")
</pallas_src>

<mosaic_0001>
module attributes {stable_mosaic.version = 11 : i64} {
  func.func @mlp_kernel(%arg0: i32, %arg1: memref<8x128xbf16, #tpu.memory_space<vmem>>, %arg2: memref<32x8xbf16, #tpu.memory_space<vmem>>, %arg3: memref<32x1xf32, #tpu.memory_space<vmem>>, %arg4: memref<4x32x32xbf16, #tpu.memory_space<vmem>>, %arg5: memref<4x32x1xf32, #tpu.memory_space<vmem>>, %arg6: memref<8x32xbf16, #tpu.memory_space<vmem>>, %arg7: memref<8x1xf32, #tpu.memory_space<vmem>>, %arg8: memref<1x128xf32, #tpu.memory_space<vmem>>) attributes {dimension_semantics = [#tpu.dimension_semantics<parallel>], iteration_bounds = array<i64: 1>, scalar_prefetch = 0 : i64, scratch_operands = 0 : i64, tpu.core_type = #tpu.core_type<tc>, window_params = [{transform_indices = @transform_0, window_bounds = array<i64: 8, 128>}, {pipeline_mode = #tpu.pipeline_mode<synchronous>, transform_indices = @transform_1, window_bounds = array<i64: 32, 8>}, {pipeline_mode = #tpu.pipeline_mode<synchronous>, transform_indices = @transform_2, window_bounds = array<i64: 32, 1>}, {pipeline_mode = #tpu.pipeline_mode<synchronous>, transform_indices = @transform_3, window_bounds = array<i64: 4, 32, 32>}, {pipeline_mode = #tpu.pipeline_mode<synchronous>, transform_indices = @transform_4, window_bounds = array<i64: 4, 32, 1>}, {pipeline_mode = #tpu.pipeline_mode<synchronous>, transform_indices = @transform_5, window_bounds = array<i64: 8, 32>}, {pipeline_mode = #tpu.pipeline_mode<synchronous>, transform_indices = @transform_6, window_bounds = array<i64: 8, 1>}, {transform_indices = @transform_7, window_bounds = array<i64: 1, 128>}]} {
    %c0 = arith.constant 0 : index
    %c0_0 = arith.constant 0 : index
    %0 = vector.load %arg2[%c0, %c0_0] : memref<32x8xbf16, #tpu.memory_space<vmem>>, vector<32x8xbf16>
    %c0_1 = arith.constant 0 : index
    %c0_2 = arith.constant 0 : index
    %1 = vector.load %arg1[%c0_1, %c0_2] : memref<8x128xbf16, #tpu.memory_space<vmem>>, vector<8x128xbf16>
    %cst = arith.constant dense<0.000000e+00> : vector<32x128xf32>
    %2 = tpu.matmul %0, %1, %cst {dimension_numbers = #tpu.dot_dimension_numbers<[1], [0], [0], [1], [0, 0, 1, 1], [], []>} : vector<32x8xbf16>, vector<8x128xbf16>, vector<32x128xf32> -> vector<32x128xf32>
    %c0_3 = arith.constant 0 : index
    %c0_4 = arith.constant 0 : index
    %3 = vector.load %arg3[%c0_3, %c0_4] : memref<32x1xf32, #tpu.memory_space<vmem>>, vector<32x1xf32>
    %4 = vector.broadcast %3 : vector<32x1xf32> to vector<32x128xf32>
    %5 = arith.addf %2, %4 : vector<32x128xf32>
    %cst_5 = arith.constant 0.000000e+00 : f32
    %6 = vector.broadcast %cst_5 : f32 to vector<32x128xf32>
    %7 = arith.maximumf %5, %6 : vector<32x128xf32>
    %c0_6 = arith.constant 0 : index
    %c0_7 = arith.constant 0 : index
    %c0_8 = arith.constant 0 : index
    %8 = vector.load %arg4[%c0_6, %c0_7, %c0_8] : memref<4x32x32xbf16, #tpu.memory_space<vmem>>, vector<1x32x32xbf16>
    %9 = vector.shape_cast %8 : vector<1x32x32xbf16> to vector<32x32xbf16>
    %10 = arith.truncf %7 : vector<32x128xf32> to vector<32x128xbf16>
    %cst_9 = arith.constant dense<0.000000e+00> : vector<32x128xf32>
    %11 = tpu.matmul %9, %10, %cst_9 {dimension_numbers = #tpu.dot_dimension_numbers<[1], [0], [0], [1], [0, 0, 1, 1], [], []>} : vector<32x32xbf16>, vector<32x128xbf16>, vector<32x128xf32> -> vector<32x128xf32>
    %c0_10 = arith.constant 0 : index
    %c0_11 = arith.constant 0 : index
    %c0_12 = arith.constant 0 : index
    %12 = vector.load %arg5[%c0_10, %c0_11, %c0_12] : memref<4x32x1xf32, #tpu.memory_space<vmem>>, vector<1x32x1xf32>
    %13 = vector.shape_cast %12 : vector<1x32x1xf32> to vector<32x1xf32>
    %14 = vector.broadcast %13 : vector<32x1xf32> to vector<32x128xf32>
    %15 = arith.addf %11, %14 : vector<32x128xf32>
    %cst_13 = arith.constant 0.000000e+00 : f32
    %16 = vector.broadcast %cst_13 : f32 to vector<32x128xf32>
    %17 = arith.maximumf %15, %16 : vector<32x128xf32>
    %c1 = arith.constant 1 : index
    %c0_14 = arith.constant 0 : index
    %c0_15 = arith.constant 0 : index
    %18 = vector.load %arg4[%c1, %c0_14, %c0_15] : memref<4x32x32xbf16, #tpu.memory_space<vmem>>, vector<1x32x32xbf16>
    %19 = vector.shape_cast %18 : vector<1x32x32xbf16> to vector<32x32xbf16>
    %20 = arith.truncf %17 : vector<32x128xf32> to vector<32x128xbf16>
    %cst_16 = arith.constant dense<0.000000e+00> : vector<32x128xf32>
    %21 = tpu.matmul %19, %20, %cst_16 {dimension_numbers = #tpu.dot_dimension_numbers<[1], [0], [0], [1], [0, 0, 1, 1], [], []>} : vector<32x32xbf16>, vector<32x128xbf16>, vector<32x128xf32> -> vector<32x128xf32>
    %c1_17 = arith.constant 1 : index
    %c0_18 = arith.constant 0 : index
    %c0_19 = arith.constant 0 : index
    %22 = vector.load %arg5[%c1_17, %c0_18, %c0_19] : memref<4x32x1xf32, #tpu.memory_space<vmem>>, vector<1x32x1xf32>
    %23 = vector.shape_cast %22 : vector<1x32x1xf32> to vector<32x1xf32>
    %24 = vector.broadcast %23 : vector<32x1xf32> to vector<32x128xf32>
    %25 = arith.addf %21, %24 : vector<32x128xf32>
    %cst_20 = arith.constant 0.000000e+00 : f32
    %26 = vector.broadcast %cst_20 : f32 to vector<32x128xf32>
    %27 = arith.maximumf %25, %26 : vector<32x128xf32>
    %c2 = arith.constant 2 : index
    %c0_21 = arith.constant 0 : index
    %c0_22 = arith.constant 0 : index
    %28 = vector.load %arg4[%c2, %c0_21, %c0_22] : memref<4x32x32xbf16, #tpu.memory_space<vmem>>, vector<1x32x32xbf16>
    %29 = vector.shape_cast %28 : vector<1x32x32xbf16> to vector<32x32xbf16>
    %30 = arith.truncf %27 : vector<32x128xf32> to vector<32x128xbf16>
    %cst_23 = arith.constant dense<0.000000e+00> : vector<32x128xf32>
    %31 = tpu.matmul %29, %30, %cst_23 {dimension_numbers = #tpu.dot_dimension_numbers<[1], [0], [0], [1], [0, 0, 1, 1], [], []>} : vector<32x32xbf16>, vector<32x128xbf16>, vector<32x128xf32> -> vector<32x128xf32>
    %c2_24 = arith.constant 2 : index
    %c0_25 = arith.constant 0 : index
    %c0_26 = arith.constant 0 : index
    %32 = vector.load %arg5[%c2_24, %c0_25, %c0_26] : memref<4x32x1xf32, #tpu.memory_space<vmem>>, vector<1x32x1xf32>
    %33 = vector.shape_cast %32 : vector<1x32x1xf32> to vector<32x1xf32>
    %34 = vector.broadcast %33 : vector<32x1xf32> to vector<32x128xf32>
    %35 = arith.addf %31, %34 : vector<32x128xf32>
    %cst_27 = arith.constant 0.000000e+00 : f32
    %36 = vector.broadcast %cst_27 : f32 to vector<32x128xf32>
    %37 = arith.maximumf %35, %36 : vector<32x128xf32>
    %c3 = arith.constant 3 : index
    %c0_28 = arith.constant 0 : index
    %c0_29 = arith.constant 0 : index
    %38 = vector.load %arg4[%c3, %c0_28, %c0_29] : memref<4x32x32xbf16, #tpu.memory_space<vmem>>, vector<1x32x32xbf16>
    %39 = vector.shape_cast %38 : vector<1x32x32xbf16> to vector<32x32xbf16>
    %40 = arith.truncf %37 : vector<32x128xf32> to vector<32x128xbf16>
    %cst_30 = arith.constant dense<0.000000e+00> : vector<32x128xf32>
    %41 = tpu.matmul %39, %40, %cst_30 {dimension_numbers = #tpu.dot_dimension_numbers<[1], [0], [0], [1], [0, 0, 1, 1], [], []>} : vector<32x32xbf16>, vector<32x128xbf16>, vector<32x128xf32> -> vector<32x128xf32>
    %c3_31 = arith.constant 3 : index
    %c0_32 = arith.constant 0 : index
    %c0_33 = arith.constant 0 : index
    %42 = vector.load %arg5[%c3_31, %c0_32, %c0_33] : memref<4x32x1xf32, #tpu.memory_space<vmem>>, vector<1x32x1xf32>
    %43 = vector.shape_cast %42 : vector<1x32x1xf32> to vector<32x1xf32>
    %44 = vector.broadcast %43 : vector<32x1xf32> to vector<32x128xf32>
    %45 = arith.addf %41, %44 : vector<32x128xf32>
    %cst_34 = arith.constant 0.000000e+00 : f32
    %46 = vector.broadcast %cst_34 : f32 to vector<32x128xf32>
    %47 = arith.maximumf %45, %46 : vector<32x128xf32>
    %c0_35 = arith.constant 0 : index
    %c0_36 = arith.constant 0 : index
    %48 = vector.load %arg6[%c0_35, %c0_36] : memref<8x32xbf16, #tpu.memory_space<vmem>>, vector<8x32xbf16>
    %49 = arith.truncf %47 : vector<32x128xf32> to vector<32x128xbf16>
    %cst_37 = arith.constant dense<0.000000e+00> : vector<8x128xf32>
    %50 = tpu.matmul %48, %49, %cst_37 {dimension_numbers = #tpu.dot_dimension_numbers<[1], [0], [0], [1], [0, 0, 1, 1], [], []>} : vector<8x32xbf16>, vector<32x128xbf16>, vector<8x128xf32> -> vector<8x128xf32>
    %51 = vector.extract_strided_slice %50 {offsets = [0, 0], sizes = [1, 128], strides = [1, 1]} : vector<8x128xf32> to vector<1x128xf32>
    %c0_38 = arith.constant 0 : index
    %c0_39 = arith.constant 0 : index
    %52 = vector.load %arg7[%c0_38, %c0_39] : memref<8x1xf32, #tpu.memory_space<vmem>>, vector<1x1xf32>
    %53 = vector.broadcast %52 : vector<1x1xf32> to vector<1x128xf32>
    %54 = arith.addf %51, %53 : vector<1x128xf32>
    %cst_40 = arith.constant 0.000000e+00 : f32
    %55 = vector.broadcast %cst_40 : f32 to vector<1x128xf32>
    %56 = arith.subf %55, %54 : vector<1x128xf32>
    %57 = math.exp %56 : vector<1x128xf32>
    %cst_41 = arith.constant 1.000000e+00 : f32
    %58 = vector.broadcast %cst_41 : f32 to vector<1x128xf32>
    %59 = arith.addf %58, %57 : vector<1x128xf32>
    %60 = tpu.reciprocal %59 {approx = true} : vector<1x128xf32> -> vector<1x128xf32>
    %c0_42 = arith.constant 0 : index
    %c0_43 = arith.constant 0 : index
    %61 = vector.load %arg8[%c0_42, %c0_43] : memref<1x128xf32, #tpu.memory_space<vmem>>, vector<1x128xf32>
    tpu.vector_store %arg8[%c0_42, %c0_43], %60 {strides = array<i32>} : memref<1x128xf32, #tpu.memory_space<vmem>>, vector<1x128xf32>,
    return
  }
  func.func @transform_0(%arg0: i32) -> (i32, i32) {
    %c0_i32 = arith.constant 0 : i32
    %c0_i32_0 = arith.constant 0 : i32
    return %c0_i32, %arg0 : i32, i32
  }
  func.func @transform_1(%arg0: i32) -> (i32, i32) {
    %c0_i32 = arith.constant 0 : i32
    %c0_i32_0 = arith.constant 0 : i32
    %c0_i32_1 = arith.constant 0 : i32
    return %c0_i32, %c0_i32_0 : i32, i32
  }
  func.func @transform_2(%arg0: i32) -> (i32, i32) {
    %c0_i32 = arith.constant 0 : i32
    %c0_i32_0 = arith.constant 0 : i32
    %c0_i32_1 = arith.constant 0 : i32
    return %c0_i32, %c0_i32_0 : i32, i32
  }
  func.func @transform_3(%arg0: i32) -> (i32, i32, i32) {
    %c0_i32 = arith.constant 0 : i32
    %c0_i32_0 = arith.constant 0 : i32
    %c0_i32_1 = arith.constant 0 : i32
    %c0_i32_2 = arith.constant 0 : i32
    return %c0_i32, %c0_i32_0, %c0_i32_1 : i32, i32, i32
  }
  func.func @transform_4(%arg0: i32) -> (i32, i32, i32) {
    %c0_i32 = arith.constant 0 : i32
    %c0_i32_0 = arith.constant 0 : i32
    %c0_i32_1 = arith.constant 0 : i32
    %c0_i32_2 = arith.constant 0 : i32
    return %c0_i32, %c0_i32_0, %c0_i32_1 : i32, i32, i32
  }
  func.func @transform_5(%arg0: i32) -> (i32, i32) {
    %c0_i32 = arith.constant 0 : i32
    %c0_i32_0 = arith.constant 0 : i32
    %c0_i32_1 = arith.constant 0 : i32
    return %c0_i32, %c0_i32_0 : i32, i32
  }
  func.func @transform_6(%arg0: i32) -> (i32, i32) {
    %c0_i32 = arith.constant 0 : i32
    %c0_i32_0 = arith.constant 0 : i32
    %c0_i32_1 = arith.constant 0 : i32
    return %c0_i32, %c0_i32_0 : i32, i32
  }
  func.func @transform_7(%arg0: i32) -> (i32, i32) {
    %c0_i32 = arith.constant 0 : i32
    %c0_i32_0 = arith.constant 0 : i32
    return %c0_i32, %arg0 : i32, i32
  }
}

</mosaic_0001>

<llo_original>
// kernel: tpu_custom_call.1
$region0: #{tpu_custom_call.1}
  #allocation0 [shape = 'u32[]', space=smem, size = 0x4, offset = 0x4, fixed_abs, tag = 'smem constant byte address 0x4 - core index']
  #allocation1 [shape = 'u32[144,128]{1,0:T(1,128)}', space=vmem, size = 0x12000, scoped, tag = 'internal scratch']
  %s0 = inlined_call_operand.vmem [shape: bf16[8,128], index: 0, kind: input, shape index: {}]
  %s1 = inlined_call_operand.vmem [shape: bf16[32,8], index: 1, kind: input, shape index: {}]
  %s2 = inlined_call_operand.vmem [shape: f32[32,1], index: 2, kind: input, shape index: {}]
  %s3 = inlined_call_operand.vmem [shape: bf16[4,32,32], index: 3, kind: input, shape index: {}]
  %s4 = inlined_call_operand.vmem [shape: f32[4,32,1], index: 4, kind: input, shape index: {}]
  %s5 = inlined_call_operand.vmem [shape: bf16[8,32], index: 5, kind: input, shape index: {}]
  %s6 = inlined_call_operand.vmem [shape: f32[8,1], index: 6, kind: input, shape index: {}]
  %s7 = inlined_call_operand.hbm [shape: f32[1,128], index: 7, kind: output, shape index: {}]
  %s8 = sld [smem:[#allocation0]]
  $region38: #{tpu_custom_call.1} parent=0
    _
  %s10 = ssub.s32 1, %s8
  %s11 = scalar_select 0, %s10, %s8
  $region1: #{tpu_custom_call.1} parent=0
    #allocation2 [shape = 'u8[512]{0}', space=vmem, size = 0x400, scoped, tag = 'output window, operand 0, single buffered']
    #allocation3 [shape = 's32[1]{0}', space=sflag, size = 0x4, scoped, tag = 'scoped memory for tpu_custom_call.1']
    %12 = vsyncpa [#allocation3], 0
    // Predicated region
    $region2: #{tpu_custom_call.1} parent=1 // pred_check
      _
    $region3: #{tpu_custom_call.1} parent=1 // pred_check_branch
      %14 = sbr.rel (0) target = $region5
    $region4: #{tpu_custom_call.1} parent=1 // pred_region
      _
    $region5: #{tpu_custom_call.1} parent=1 // pred_fallthru
      _
    // Predicated region
    $region6: #{tpu_custom_call.1} parent=1 // pred_check
      _
    $region7: #{tpu_custom_call.1} parent=1 // pred_check_branch
      %16 = sbr.rel (0) target = $region9
    $region8: #{tpu_custom_call.1} parent=1 // pred_region
      _
    $region9: #{tpu_custom_call.1} parent=1 // pred_fallthru
      _
    // Predicated region
    $region10: #{tpu_custom_call.1} parent=1 // pred_check
      _
    $region11: #{tpu_custom_call.1} parent=1 // pred_check_branch
      %18 = sbr.rel (0) target = $region13
    $region12: #{tpu_custom_call.1} parent=1 // pred_region
      _
    $region13: #{tpu_custom_call.1} parent=1 // pred_fallthru
      _
    // Predicated region
    $region14: #{tpu_custom_call.1} parent=1 // pred_check
      _
    $region15: #{tpu_custom_call.1} parent=1 // pred_check_branch
      %20 = sbr.rel (0) target = $region17
    $region16: #{tpu_custom_call.1} parent=1 // pred_region
      _
    $region17: #{tpu_custom_call.1} parent=1 // pred_fallthru
      _
    // Predicated region
    $region18: #{tpu_custom_call.1} parent=1 // pred_check
      _
    $region19: #{tpu_custom_call.1} parent=1 // pred_check_branch
      %22 = sbr.rel (0) target = $region21
    $region20: #{tpu_custom_call.1} parent=1 // pred_region
      _
    $region21: #{tpu_custom_call.1} parent=1 // pred_fallthru
      _
    // Predicated region
    $region22: #{tpu_custom_call.1} parent=1 // pred_check
      _
    $region23: #{tpu_custom_call.1} parent=1 // pred_check_branch
      %24 = sbr.rel (0) target = $region25
    $region24: #{tpu_custom_call.1} parent=1 // pred_region
      _
    $region25: #{tpu_custom_call.1} parent=1 // pred_fallthru
      _
    // Predicated region
    $region26: #{tpu_custom_call.1} parent=1 // pred_check
      _
    $region27: #{tpu_custom_call.1} parent=1 // pred_check_branch
      %26 = sbr.rel (0) target = $region29
    $region28: #{tpu_custom_call.1} parent=1 // pred_region
      _
    $region29: #{tpu_custom_call.1} parent=1 // pred_fallthru
      _
    %v28 = vld [vmem:[%s1] sm:$0xf]
    %v29 = vld [vmem:[%s1 + $0x4] sm:$0xf]
    %v30 = vld [vmem:[%s1 + $0x8] sm:$0xf]
    %v31 = vld [vmem:[%s1 + $0xc] sm:$0xf]
    %v32 = vld [vmem:[%s0] sm:$0xf]
    %v33 = vld [vmem:[%s2] sm:$0xff]
    %v34 = vld [vmem:[%s2 + $0x8] sm:$0xff]
    %v35 = vld [vmem:[%s2 + $0x10] sm:$0xff]
    %v36 = vld [vmem:[%s2 + $0x18] sm:$0xff]
    %38 = vset.pattern.permute.xlu0 0
    %39 = vperm.xlu0 %38, %v33
    %v40 = vpop.permute.xlu0 %39
    %43 = vset.pattern.permute.xlu0 0
    %44 = vperm.xlu0 %43, %v34
    %v45 = vpop.permute.xlu0 %44
    %48 = vset.pattern.permute.xlu0 0
    %49 = vperm.xlu0 %48, %v35
    %v50 = vpop.permute.xlu0 %49
    %53 = vset.pattern.permute.xlu0 0
    %54 = vperm.xlu0 %53, %v36
    %v55 = vpop.permute.xlu0 %54
    %v61 = vunpack.c.l.b16 %v28
    %v62 = vunpack.c.l.b16 %v29
    %v63 = vunpack.c.l.b16 %v30
    %v64 = vunpack.c.l.b16 %v31
    %v65 = vpack.c.b16 %v62, %v61
    %v66 = vpack.c.b16 %v64, %v63
    %vm67 = vcmask 64512
    %v69 = vsel %vm67, %v65, 0
    %v72 = vsel %vm67, %v66, 0
    %vm74 = vcmask 1043456
    %v76 = vsel %vm74, %v32, 0
    %78 = vmatprep.subr.bf16.mxu0 0
    %79 = vmatpush1.bf16.msra.mxu0 0
    %80 = vmatprep.subr.bf16.mxu0 0
    %81 = vmatpush1.bf16.msra.mxu0 0
    %82 = vmatprep.subr.bf16.mxu0 0
    %83 = vmatpush1.bf16.msra.mxu0 0
    %84 = vmatprep.subr.bf16.mxu0 0
    %85 = vmatpush1.bf16.msra.mxu0 0
    %86 = vmatprep.subr.bf16.mxu0 0
    %87 = vmatpush1.bf16.msra.mxu0 0
    %88 = vmatprep.subr.bf16.mxu0 0
    %89 = vmatpush1.bf16.msra.mxu0 0
    %90 = vmatprep.subr.bf16.mxu0 0
    %91 = vmatpush1.bf16.msra.mxu0 0
    %92 = vmatprep.subr.bf16.mxu0 0
    %93 = vmatpush1.bf16.msra.mxu0 %v76
    %94 = vmatprep.subr.bf16.mxu0 0
    %95 = vmatpush2.bf16.msra.mxu0 0
    %96 = vmatprep.subr.bf16.mxu0 0
    %97 = vmatpush2.bf16.msra.mxu0 0
    %98 = vmatprep.subr.bf16.mxu0 0
    %99 = vmatpush2.bf16.msra.mxu0 0
    %100 = vmatprep.subr.bf16.mxu0 0
    %101 = vmatpush2.bf16.msra.mxu0 0
    %102 = vmatprep.subr.bf16.mxu0 0
    %103 = vmatpush2.bf16.msra.mxu0 0
    %104 = vmatprep.subr.bf16.mxu0 0
    %105 = vmatpush2.bf16.msra.mxu0 0
    %106 = vmatprep.subr.bf16.mxu0 0
    %107 = vmatpush2.bf16.msra.mxu0 0
    %108 = vmatprep.subr.bf16.mxu0 0
    %109 = vmatpush2.bf16.msra.mxu0 0
    %110 = vmatprep.mubr.bf16.mxu0 0
    %111 = vmatmul.mubr.bf16.gmra.mxu0 %v69
    %v112 = vpop.f32.mrf.mxu0
    %v113 = vadd.f32 %v40, %v112
    %v114 = vpop.f32.mrf.mxu0
    %v115 = vpop.f32.mrf.mxu0
    %v116 = vadd.f32 %v45, %v115
    %v117 = vpop.f32.mrf.mxu0
    %118 = vmatprep.mubr.bf16.mxu0 0
    %119 = vmatmul.mubr.bf16.gmra.mxu0 %v72
    %v120 = vpop.f32.mrf.mxu0
    %v121 = vadd.f32 %v50, %v120
    %v122 = vpop.f32.mrf.mxu0
    %v123 = vpop.f32.mrf.mxu0
    %v124 = vadd.f32 %v55, %v123
    %v125 = vpop.f32.mrf.mxu0
    %126 = vdwg.mxu0
    %v127 = vmax.f32 %v113, 0.0
    %v128 = vmax.f32 %v116, 0.0
    %v129 = vmax.f32 %v121, 0.0
    %v130 = vmax.f32 %v124, 0.0
    %v131 = vld [vmem:[%s3] sm:$0xf]
    %v132 = vld [vmem:[%s3 + $0x4] sm:$0xf]
    %v133 = vld [vmem:[%s3 + $0x8] sm:$0xf]
    %v134 = vld [vmem:[%s3 + $0xc] sm:$0xf]
    %v135 = vpack.c.bf16 %v128, %v127
    %v136 = vpack.c.bf16 %v130, %v129
    %v137 = vld [vmem:[%s4] sm:$0xff]
    %v138 = vld [vmem:[%s4 + $0x8] sm:$0xff]
    %v139 = vld [vmem:[%s4 + $0x10] sm:$0xff]
    %v140 = vld [vmem:[%s4 + $0x18] sm:$0xff]
    %142 = vset.pattern.permute.xlu0 0
    %143 = vperm.xlu0 %142, %v137
    %v144 = vpop.permute.xlu0 %143
    %147 = vset.pattern.permute.xlu0 0
    %148 = vperm.xlu0 %147, %v138
    %v149 = vpop.permute.xlu0 %148
    %152 = vset.pattern.permute.xlu0 0
    %153 = vperm.xlu0 %152, %v139
    %v154 = vpop.permute.xlu0 %153
    %157 = vset.pattern.permute.xlu0 0
    %158 = vperm.xlu0 %157, %v140
    %v159 = vpop.permute.xlu0 %158
    %v165 = vunpack.c.l.b16 %v131
    %v166 = vunpack.c.l.b16 %v132
    %v167 = vunpack.c.l.b16 %v133
    %v168 = vunpack.c.l.b16 %v134
    %v169 = vpack.c.b16 %v166, %v165
    %v170 = vpack.c.b16 %v168, %v167
    %vm171 = vcmask 261120
    %v173 = vsel %vm171, %v169, 0
    %v176 = vsel %vm171, %v170, 0
    %178 = vmatprep.subr.bf16.mxu0 0
    %179 = vmatpush1.bf16.msra.mxu0 0
    %180 = vmatprep.subr.bf16.mxu0 0
    %181 = vmatpush1.bf16.msra.mxu0 0
    %182 = vmatprep.subr.bf16.mxu0 0
    %183 = vmatpush1.bf16.msra.mxu0 0
    %184 = vmatprep.subr.bf16.mxu0 0
    %185 = vmatpush1.bf16.msra.mxu0 0
    %186 = vmatprep.subr.bf16.mxu0 0
    %187 = vmatpush1.bf16.msra.mxu0 0
    %188 = vmatprep.subr.bf16.mxu0 0
    %189 = vmatpush1.bf16.msra.mxu0 0
    %190 = vmatprep.subr.bf16.mxu0 0
    %191 = vmatpush1.bf16.msra.mxu0 %v136
    %192 = vmatprep.subr.bf16.mxu0 0
    %193 = vmatpush1.bf16.msra.mxu0 %v135
    %194 = vmatprep.subr.bf16.mxu0 0
    %195 = vmatpush2.bf16.msra.mxu0 0
    %196 = vmatprep.subr.bf16.mxu0 0
    %197 = vmatpush2.bf16.msra.mxu0 0
    %198 = vmatprep.subr.bf16.mxu0 0
    %199 = vmatpush2.bf16.msra.mxu0 0
    %200 = vmatprep.subr.bf16.mxu0 0
    %201 = vmatpush2.bf16.msra.mxu0 0
    %202 = vmatprep.subr.bf16.mxu0 0
    %203 = vmatpush2.bf16.msra.mxu0 0
    %204 = vmatprep.subr.bf16.mxu0 0
    %205 = vmatpush2.bf16.msra.mxu0 0
    %206 = vmatprep.subr.bf16.mxu0 0
    %207 = vmatpush2.bf16.msra.mxu0 0
    %208 = vmatprep.subr.bf16.mxu0 0
    %209 = vmatpush2.bf16.msra.mxu0 0
    %210 = vmatprep.mubr.bf16.mxu0 0
    %211 = vmatmul.mubr.bf16.gmra.mxu0 %v173
    %v212 = vpop.f32.mrf.mxu0
    %v213 = vadd.f32 %v144, %v212
    %v214 = vpop.f32.mrf.mxu0
    %v215 = vpop.f32.mrf.mxu0
    %v216 = vadd.f32 %v149, %v215
    %v217 = vpop.f32.mrf.mxu0
    %218 = vmatprep.mubr.bf16.mxu0 0
    %219 = vmatmul.mubr.bf16.gmra.mxu0 %v176
    %v220 = vpop.f32.mrf.mxu0
    %v221 = vadd.f32 %v154, %v220
    %v222 = vpop.f32.mrf.mxu0
    %v223 = vpop.f32.mrf.mxu0
    %v224 = vadd.f32 %v159, %v223
    %v225 = vpop.f32.mrf.mxu0
    %226 = vdwg.mxu0
    %v227 = vmax.f32 %v213, 0.0
    %v228 = vmax.f32 %v216, 0.0
    %v229 = vmax.f32 %v221, 0.0
    %v230 = vmax.f32 %v224, 0.0
    %s231 = scalar_lea.vmem %s3, 16
    %v232 = vld [vmem:[%s231] sm:$0xf]
    %v233 = vld [vmem:[%s231 + $0x4] sm:$0xf]
    %v234 = vld [vmem:[%s231 + $0x8] sm:$0xf]
    %v235 = vld [vmem:[%s231 + $0xc] sm:$0xf]
    %v236 = vpack.c.bf16 %v228, %v227
    %v237 = vpack.c.bf16 %v230, %v229
    %s238 = scalar_lea.vmem %s4, 32
    %v239 = vld [vmem:[%s238] sm:$0xff]
    %v240 = vld [vmem:[%s238 + $0x8] sm:$0xff]
    %v241 = vld [vmem:[%s238 + $0x10] sm:$0xff]
    %v242 = vld [vmem:[%s238 + $0x18] sm:$0xff]
    %244 = vset.pattern.permute.xlu0 0
    %245 = vperm.xlu0 %244, %v239
    %v246 = vpop.permute.xlu0 %245
    %249 = vset.pattern.permute.xlu0 0
    %250 = vperm.xlu0 %249, %v240
    %v251 = vpop.permute.xlu0 %250
    %254 = vset.pattern.permute.xlu0 0
    %255 = vperm.xlu0 %254, %v241
    %v256 = vpop.permute.xlu0 %255
    %259 = vset.pattern.permute.xlu0 0
    %260 = vperm.xlu0 %259, %v242
    %v261 = vpop.permute.xlu0 %260
    %v267 = vunpack.c.l.b16 %v232
    %v268 = vunpack.c.l.b16 %v233
    %v269 = vunpack.c.l.b16 %v234
    %v270 = vunpack.c.l.b16 %v235
    %v271 = vpack.c.b16 %v268, %v267
    %v272 = vpack.c.b16 %v270, %v269
    %v274 = vsel %vm171, %v271, 0
    %v277 = vsel %vm171, %v272, 0
    %279 = vmatprep.subr.bf16.mxu0 0
    %280 = vmatpush1.bf16.msra.mxu0 0
    %281 = vmatprep.subr.bf16.mxu0 0
    %282 = vmatpush1.bf16.msra.mxu0 0
    %283 = vmatprep.subr.bf16.mxu0 0
    %284 = vmatpush1.bf16.msra.mxu0 0
    %285 = vmatprep.subr.bf16.mxu0 0
    %286 = vmatpush1.bf16.msra.mxu0 0
    %287 = vmatprep.subr.bf16.mxu0 0
    %288 = vmatpush1.bf16.msra.mxu0 0
    %289 = vmatprep.subr.bf16.mxu0 0
    %290 = vmatpush1.bf16.msra.mxu0 0
    %291 = vmatprep.subr.bf16.mxu0 0
    %292 = vmatpush1.bf16.msra.mxu0 %v237
    %293 = vmatprep.subr.bf16.mxu0 0
    %294 = vmatpush1.bf16.msra.mxu0 %v236
    %295 = vmatprep.subr.bf16.mxu0 0
    %296 = vmatpush2.bf16.msra.mxu0 0
    %297 = vmatprep.subr.bf16.mxu0 0
    %298 = vmatpush2.bf16.msra.mxu0 0
    %299 = vmatprep.subr.bf16.mxu0 0
    %300 = vmatpush2.bf16.msra.mxu0 0
    %301 = vmatprep.subr.bf16.mxu0 0
    %302 = vmatpush2.bf16.msra.mxu0 0
    %303 = vmatprep.subr.bf16.mxu0 0
    %304 = vmatpush2.bf16.msra.mxu0 0
    %305 = vmatprep.subr.bf16.mxu0 0
    %306 = vmatpush2.bf16.msra.mxu0 0
    %307 = vmatprep.subr.bf16.mxu0 0
    %308 = vmatpush2.bf16.msra.mxu0 0
    %309 = vmatprep.subr.bf16.mxu0 0
    %310 = vmatpush2.bf16.msra.mxu0 0
    %311 = vmatprep.mubr.bf16.mxu0 0
    %312 = vmatmul.mubr.bf16.gmra.mxu0 %v274
    %v313 = vpop.f32.mrf.mxu0
    %v314 = vadd.f32 %v246, %v313
    %v315 = vpop.f32.mrf.mxu0
    %v316 = vpop.f32.mrf.mxu0
    %v317 = vadd.f32 %v251, %v316
    %v318 = vpop.f32.mrf.mxu0
    %319 = vmatprep.mubr.bf16.mxu0 0
    %320 = vmatmul.mubr.bf16.gmra.mxu0 %v277
    %v321 = vpop.f32.mrf.mxu0
    %v322 = vadd.f32 %v256, %v321
    %v323 = vpop.f32.mrf.mxu0
    %v324 = vpop.f32.mrf.mxu0
    %v325 = vadd.f32 %v261, %v324
    %v326 = vpop.f32.mrf.mxu0
    %327 = vdwg.mxu0
    %v328 = vmax.f32 %v314, 0.0
    %v329 = vmax.f32 %v317, 0.0
    %v330 = vmax.f32 %v322, 0.0
    %v331 = vmax.f32 %v325, 0.0
    %s332 = scalar_lea.vmem %s3, 32
    %v333 = vld [vmem:[%s332] sm:$0xf]
    %v334 = vld [vmem:[%s332 + $0x4] sm:$0xf]
    %v335 = vld [vmem:[%s332 + $0x8] sm:$0xf]
    %v336 = vld [vmem:[%s332 + $0xc] sm:$0xf]
    %v337 = vpack.c.bf16 %v329, %v328
    %v338 = vpack.c.bf16 %v331, %v330
    %s339 = scalar_lea.vmem %s4, 64
    %v340 = vld [vmem:[%s339] sm:$0xff]
    %v341 = vld [vmem:[%s339 + $0x8] sm:$0xff]
    %v342 = vld [vmem:[%s339 + $0x10] sm:$0xff]
    %v343 = vld [vmem:[%s339 + $0x18] sm:$0xff]
    %345 = vset.pattern.permute.xlu0 0
    %346 = vperm.xlu0 %345, %v340
    %v347 = vpop.permute.xlu0 %346
    %350 = vset.pattern.permute.xlu0 0
    %351 = vperm.xlu0 %350, %v341
    %v352 = vpop.permute.xlu0 %351
    %355 = vset.pattern.permute.xlu0 0
    %356 = vperm.xlu0 %355, %v342
    %v357 = vpop.permute.xlu0 %356
    %360 = vset.pattern.permute.xlu0 0
    %361 = vperm.xlu0 %360, %v343
    %v362 = vpop.permute.xlu0 %361
    %v368 = vunpack.c.l.b16 %v333
    %v369 = vunpack.c.l.b16 %v334
    %v370 = vunpack.c.l.b16 %v335
    %v371 = vunpack.c.l.b16 %v336
    %v372 = vpack.c.b16 %v369, %v368
    %v373 = vpack.c.b16 %v371, %v370
    %v375 = vsel %vm171, %v372, 0
    %v378 = vsel %vm171, %v373, 0
    %380 = vmatprep.subr.bf16.mxu0 0
    %381 = vmatpush1.bf16.msra.mxu0 0
    %382 = vmatprep.subr.bf16.mxu0 0
    %383 = vmatpush1.bf16.msra.mxu0 0
    %384 = vmatprep.subr.bf16.mxu0 0
    %385 = vmatpush1.bf16.msra.mxu0 0
    %386 = vmatprep.subr.bf16.mxu0 0
    %387 = vmatpush1.bf16.msra.mxu0 0
    %388 = vmatprep.subr.bf16.mxu0 0
    %389 = vmatpush1.bf16.msra.mxu0 0
    %390 = vmatprep.subr.bf16.mxu0 0
    %391 = vmatpush1.bf16.msra.mxu0 0
    %392 = vmatprep.subr.bf16.mxu0 0
    %393 = vmatpush1.bf16.msra.mxu0 %v338
    %394 = vmatprep.subr.bf16.mxu0 0
    %395 = vmatpush1.bf16.msra.mxu0 %v337
    %396 = vmatprep.subr.bf16.mxu0 0
    %397 = vmatpush2.bf16.msra.mxu0 0
    %398 = vmatprep.subr.bf16.mxu0 0
    %399 = vmatpush2.bf16.msra.mxu0 0
    %400 = vmatprep.subr.bf16.mxu0 0
    %401 = vmatpush2.bf16.msra.mxu0 0
    %402 = vmatprep.subr.bf16.mxu0 0
    %403 = vmatpush2.bf16.msra.mxu0 0
    %404 = vmatprep.subr.bf16.mxu0 0
    %405 = vmatpush2.bf16.msra.mxu0 0
    %406 = vmatprep.subr.bf16.mxu0 0
    %407 = vmatpush2.bf16.msra.mxu0 0
    %408 = vmatprep.subr.bf16.mxu0 0
    %409 = vmatpush2.bf16.msra.mxu0 0
    %410 = vmatprep.subr.bf16.mxu0 0
    %411 = vmatpush2.bf16.msra.mxu0 0
    %412 = vmatprep.mubr.bf16.mxu0 0
    %413 = vmatmul.mubr.bf16.gmra.mxu0 %v375
    %v414 = vpop.f32.mrf.mxu0
    %v415 = vadd.f32 %v347, %v414
    %v416 = vpop.f32.mrf.mxu0
    %v417 = vpop.f32.mrf.mxu0
    %v418 = vadd.f32 %v352, %v417
    %v419 = vpop.f32.mrf.mxu0
    %420 = vmatprep.mubr.bf16.mxu0 0
    %421 = vmatmul.mubr.bf16.gmra.mxu0 %v378
    %v422 = vpop.f32.mrf.mxu0
    %v423 = vadd.f32 %v357, %v422
    %v424 = vpop.f32.mrf.mxu0
    %v425 = vpop.f32.mrf.mxu0
    %v426 = vadd.f32 %v362, %v425
    %v427 = vpop.f32.mrf.mxu0
    %428 = vdwg.mxu0
    %v429 = vmax.f32 %v415, 0.0
    %v430 = vmax.f32 %v418, 0.0
    %v431 = vmax.f32 %v423, 0.0
    %v432 = vmax.f32 %v426, 0.0
    %s433 = scalar_lea.vmem %s3, 48
    %v434 = vld [vmem:[%s433] sm:$0xf]
    %v435 = vld [vmem:[%s433 + $0x4] sm:$0xf]
    %v436 = vld [vmem:[%s433 + $0x8] sm:$0xf]
    %v437 = vld [vmem:[%s433 + $0xc] sm:$0xf]
    %v438 = vpack.c.bf16 %v430, %v429
    %v439 = vpack.c.bf16 %v432, %v431
    %s440 = scalar_lea.vmem %s4, 96
    %v441 = vld [vmem:[%s440] sm:$0xff]
    %v442 = vld [vmem:[%s440 + $0x8] sm:$0xff]
    %v443 = vld [vmem:[%s440 + $0x10] sm:$0xff]
    %v444 = vld [vmem:[%s440 + $0x18] sm:$0xff]
    %446 = vset.pattern.permute.xlu0 0
    %447 = vperm.xlu0 %446, %v441
    %v448 = vpop.permute.xlu0 %447
    %451 = vset.pattern.permute.xlu0 0
    %452 = vperm.xlu0 %451, %v442
    %v453 = vpop.permute.xlu0 %452
    %456 = vset.pattern.permute.xlu0 0
    %457 = vperm.xlu0 %456, %v443
    %v458 = vpop.permute.xlu0 %457
    %461 = vset.pattern.permute.xlu0 0
    %462 = vperm.xlu0 %461, %v444
    %v463 = vpop.permute.xlu0 %462
    %v469 = vunpack.c.l.b16 %v434
    %v470 = vunpack.c.l.b16 %v435
    %v471 = vunpack.c.l.b16 %v436
    %v472 = vunpack.c.l.b16 %v437
    %v473 = vpack.c.b16 %v470, %v469
    %v474 = vpack.c.b16 %v472, %v471
    %v476 = vsel %vm171, %v473, 0
    %v479 = vsel %vm171, %v474, 0
    %481 = vmatprep.subr.bf16.mxu0 0
    %482 = vmatpush1.bf16.msra.mxu0 0
    %483 = vmatprep.subr.bf16.mxu0 0
    %484 = vmatpush1.bf16.msra.mxu0 0
    %485 = vmatprep.subr.bf16.mxu0 0
    %486 = vmatpush1.bf16.msra.mxu0 0
    %487 = vmatprep.subr.bf16.mxu0 0
    %488 = vmatpush1.bf16.msra.mxu0 0
    %489 = vmatprep.subr.bf16.mxu0 0
    %490 = vmatpush1.bf16.msra.mxu0 0
    %491 = vmatprep.subr.bf16.mxu0 0
    %492 = vmatpush1.bf16.msra.mxu0 0
    %493 = vmatprep.subr.bf16.mxu0 0
    %494 = vmatpush1.bf16.msra.mxu0 %v439
    %495 = vmatprep.subr.bf16.mxu0 0
    %496 = vmatpush1.bf16.msra.mxu0 %v438
    %497 = vmatprep.subr.bf16.mxu0 0
    %498 = vmatpush2.bf16.msra.mxu0 0
    %499 = vmatprep.subr.bf16.mxu0 0
    %500 = vmatpush2.bf16.msra.mxu0 0
    %501 = vmatprep.subr.bf16.mxu0 0
    %502 = vmatpush2.bf16.msra.mxu0 0
    %503 = vmatprep.subr.bf16.mxu0 0
    %504 = vmatpush2.bf16.msra.mxu0 0
    %505 = vmatprep.subr.bf16.mxu0 0
    %506 = vmatpush2.bf16.msra.mxu0 0
    %507 = vmatprep.subr.bf16.mxu0 0
    %508 = vmatpush2.bf16.msra.mxu0 0
    %509 = vmatprep.subr.bf16.mxu0 0
    %510 = vmatpush2.bf16.msra.mxu0 0
    %511 = vmatprep.subr.bf16.mxu0 0
    %512 = vmatpush2.bf16.msra.mxu0 0
    %513 = vmatprep.mubr.bf16.mxu0 0
    %514 = vmatmul.mubr.bf16.gmra.mxu0 %v476
    %v515 = vpop.f32.mrf.mxu0
    %v516 = vadd.f32 %v448, %v515
    %v517 = vpop.f32.mrf.mxu0
    %v518 = vpop.f32.mrf.mxu0
    %v519 = vadd.f32 %v453, %v518
    %v520 = vpop.f32.mrf.mxu0
    %521 = vmatprep.mubr.bf16.mxu0 0
    %522 = vmatmul.mubr.bf16.gmra.mxu0 %v479
    %v523 = vpop.f32.mrf.mxu0
    %v524 = vadd.f32 %v458, %v523
    %v525 = vpop.f32.mrf.mxu0
    %v526 = vpop.f32.mrf.mxu0
    %v527 = vadd.f32 %v463, %v526
    %v528 = vpop.f32.mrf.mxu0
    %529 = vdwg.mxu0
    %v530 = vmax.f32 %v516, 0.0
    %v531 = vmax.f32 %v519, 0.0
    %v532 = vmax.f32 %v524, 0.0
    %v533 = vmax.f32 %v527, 0.0
    %v534 = vld [vmem:[%s5] sm:$0xf]
    %v535 = vpack.c.bf16 %v531, %v530
    %v536 = vpack.c.bf16 %v533, %v532
    %v538 = vsel %vm171, %v534, 0
    %540 = vmatprep.subr.bf16.mxu0 0
    %541 = vmatpush1.bf16.msra.mxu0 0
    %542 = vmatprep.subr.bf16.mxu0 0
    %543 = vmatpush1.bf16.msra.mxu0 0
    %544 = vmatprep.subr.bf16.mxu0 0
    %545 = vmatpush1.bf16.msra.mxu0 0
    %546 = vmatprep.subr.bf16.mxu0 0
    %547 = vmatpush1.bf16.msra.mxu0 0
    %548 = vmatprep.subr.bf16.mxu0 0
    %549 = vmatpush1.bf16.msra.mxu0 0
    %550 = vmatprep.subr.bf16.mxu0 0
    %551 = vmatpush1.bf16.msra.mxu0 0
    %552 = vmatprep.subr.bf16.mxu0 0
    %553 = vmatpush1.bf16.msra.mxu0 %v536
    %554 = vmatprep.subr.bf16.mxu0 0
    %555 = vmatpush1.bf16.msra.mxu0 %v535
    %556 = vmatprep.subr.bf16.mxu0 0
    %557 = vmatpush2.bf16.msra.mxu0 0
    %558 = vmatprep.subr.bf16.mxu0 0
    %559 = vmatpush2.bf16.msra.mxu0 0
    %560 = vmatprep.subr.bf16.mxu0 0
    %561 = vmatpush2.bf16.msra.mxu0 0
    %562 = vmatprep.subr.bf16.mxu0 0
    %563 = vmatpush2.bf16.msra.mxu0 0
    %564 = vmatprep.subr.bf16.mxu0 0
    %565 = vmatpush2.bf16.msra.mxu0 0
    %566 = vmatprep.subr.bf16.mxu0 0
    %567 = vmatpush2.bf16.msra.mxu0 0
    %568 = vmatprep.subr.bf16.mxu0 0
    %569 = vmatpush2.bf16.msra.mxu0 0
    %570 = vmatprep.subr.bf16.mxu0 0
    %571 = vmatpush2.bf16.msra.mxu0 0
    %572 = vmatprep.mubr.bf16.mxu0 0
    %573 = vmatmul.mubr.bf16.gmra.mxu0 %v538
    %v574 = vpop.f32.mrf.mxu0
    %v575 = vadd.f32 0.0, %v574
    %v576 = vpop.f32.mrf.mxu0
    %v577 = vpop.f32.mrf.mxu0
    %v578 = vpop.f32.mrf.mxu0
    %579 = vdwg.mxu0
    %v580 = vld [vmem:[%s6] sm:$0x1]
    %582 = vset.pattern.permute.xlu0 0
    %583 = vperm.xlu0 %582, %v580
    %v584 = vpop.permute.xlu0 %583
    %v586 = vadd.f32 %v575, %v584
    %v587 = vsub.f32 0.0, %v586
    %v588 = vmul.f32 %v587, 1.442695
    %v589 = vpow.pop %v588
    %v590 = vadd.f32 %v589, 1.0
    %v591 = vrcp.pop %v590
    %592 = vst [vmem:[#allocation2] sm:$0x1] %v591
    // Predicated region
    $region30: #{tpu_custom_call.1} parent=1 // pred_check
      _
    $region31: #{tpu_custom_call.1} parent=1 // pred_check_branch
      %594 = sbr.rel (0) target = $region33
    $region32: #{tpu_custom_call.1} parent=1 // pred_region
      %s596 = ssub.s32 16, 16
      %597 = vsyncadd [#allocation3], %s596
      %s599 = sshll.u32 [#allocation2], 4
      %s600 = int_to_ptr.vmem [resolvable:$true] %s599
      %602 = dma.vmem_to_hbm [thread:$0]  %s600, 16, %s7, [#allocation3]
    $region33: #{tpu_custom_call.1} parent=1 // pred_fallthru
      _
    // Predicated region
    $region34: #{tpu_custom_call.1} parent=1 // pred_check
      _
    $region35: #{tpu_custom_call.1} parent=1 // pred_check_branch
      %604 = sbr.rel (0) target = $region37
    $region36: #{tpu_custom_call.1} parent=1 // pred_region
      %605 = dma.done [#allocation3], 16
    $region37: #{tpu_custom_call.1} parent=1 // pred_fallthru
      _
    %606 = vsyncpa [#allocation3], 1

</llo_original>
